<compile_context>
chip_gen: v5e
topology: v5e:2x2
jax: 0.10.0
libtpu: 0.0.40
codegen_flags: <defaults>
</compile_context>

<pallas_src>
import jax
import jax.numpy as jnp
from jax.experimental import pallas as pl
from jax.experimental.pallas import tpu as pltpu


def _drop_path_kernel(scale_ref, x_ref, o_ref):
    # scale_ref: (TB, 1) float32 per-sample scale (0.0 if dropped, 1/keep_prob if kept)
    # x_ref / o_ref: (TB, T) tiles of the flattened (B, C*H*W) activation.
    x = x_ref[...]
    if x.dtype in (jnp.bfloat16, jnp.float16):
        # Native low-precision multiply (v6e/v7x bf16 VPU); compiler re-inserts
        # casts on v5e. Halves vreg pressure vs. the f32 round trip.
        o_ref[...] = x * scale_ref[...].astype(x.dtype)
    else:
        o_ref[...] = (x.astype(jnp.float32) * scale_ref[...]).astype(o_ref.dtype)


def _pick_lane_block(D, cols_budget):
    """Lane (last-dim) block: full D if it fits, else a multiple of 128.

    If D is itself a multiple of 128, prefer a divisor of D (within 2x of the
    budget) so there is no ragged tail block with masked stores.
    """
    LANE = 128
    if D <= cols_budget:
        return D
    budget_lanes = max(1, cols_budget // LANE)
    if D % LANE == 0:
        n_lanes = D // LANE
        lo = max(1, budget_lanes // 2)
        for d in range(min(budget_lanes, n_lanes), lo - 1, -1):
            if n_lanes % d == 0:
                return d * LANE
    return max(LANE, budget_lanes * LANE)


def _pick_block(B, D, itemsize, target_bytes=2 * 1024 * 1024):
    """Pick (TB, T) block dims for the flattened (B, D) view.

    TB is B or a multiple of the dtype's packed sublane tile; T is D or a
    multiple of 128 (preferring divisors of D). Guarantees >= 2 grid programs
    when there is >= 1 MiB of work so both v7x TensorCores are fed.
    """
    LANE = 128
    sub = max(8, 32 // max(1, itemsize))  # f32 -> 8, bf16/f16 -> 16, int8/fp8 -> 32

    # --- rows per block (sublane dim) ---
    if B <= sub:
        TB = B
    else:
        rows_fit = max(1, target_bytes // max(1, D * itemsize))
        if rows_fit >= B:
            TB = B
        else:
            TB = max(sub, (rows_fit // sub) * sub)

    # --- cols per block (lane dim) ---
    cols_budget = max(LANE, target_bytes // max(1, TB * itemsize))
    T = _pick_lane_block(D, cols_budget)

    # --- v7x megacore: ensure >= 2 programs when there is enough work ---
    total_bytes = B * D * itemsize
    if pl.cdiv(B, TB) * pl.cdiv(D, T) < 2 and total_bytes >= (1 << 20):
        if T >= 2 * LANE:
            T = _pick_lane_block(D, T // 2)
        elif B > sub:
            new_tb = max(sub, ((pl.cdiv(B, 2) + sub - 1) // sub) * sub)
            if new_tb < B:
                TB = new_tb
    return TB, T


def drop_path_pallas(x, drop_prob: float = 0.0, training: bool = False,
                     key=None, seed: int = 0, donate_x: bool = False):
    """Pallas implementation of DropPath.forward for N-leading input x.

    Pass a fresh `key` (or `seed`) each step during training.
    """
    if drop_prob == 0.0 or not training:
        return x
    keep_prob = 1.0 - float(drop_prob)

    orig_shape = x.shape
    B = x.shape[0]
    x2 = x.reshape(B, -1)  # lane-dense flattened view (B, C*H*W)
    D = x2.shape[1]
    itemsize = jnp.dtype(x2.dtype).itemsize

    # Per-sample mask (tiny, O(B)): floor(keep_prob + U[0,1)) in {0, 1}.
    if key is None:
        key = jax.random.PRNGKey(seed)
    u = jax.random.uniform(key, (B,), dtype=jnp.float32)
    keep = jnp.floor(keep_prob + u)
    scale = (keep * (1.0 / keep_prob)).astype(jnp.float32).reshape(B, 1)

    TB, T = _pick_block(B, D, itemsize)
    grid = (pl.cdiv(B, TB), pl.cdiv(D, T))

    # VMEM cap derived from the block: double-buffered in + out tiles
    # (+ tiny scale tiles), with 2x headroom; clamped for v7x's 64 MiB VMEM.
    block_bytes = TB * T * itemsize
    needed = 4 * block_bytes + 4 * TB * 4
    vmem_limit = int(min(64 * 1024 * 1024, max(2 * needed, 4 * 1024 * 1024)))

    cost = pl.CostEstimate(
        flops=B * D,
        transcendentals=0,
        bytes_accessed=2 * B * D * itemsize + 4 * B,
    )

    out = pl.pallas_call(
        _drop_path_kernel,
        out_shape=jax.ShapeDtypeStruct(x2.shape, x2.dtype),
        grid=grid,
        in_specs=[
            pl.BlockSpec((TB, 1), lambda i, j: (i, 0)),   # per-sample scale
            pl.BlockSpec((TB, T), lambda i, j: (i, j)),   # activation tile
        ],
        out_specs=pl.BlockSpec((TB, T), lambda i, j: (i, j)),
        compiler_params=pltpu.CompilerParams(
            dimension_semantics=("parallel", "parallel"),
            vmem_limit_bytes=vmem_limit,
        ),
        cost_estimate=cost,
        input_output_aliases=({1: 0} if donate_x else {}),
    )(scale, x2)
    return out.reshape(orig_shape)


class DropPath:
    """Minimal stand-in for the nn.Module: holds drop_prob + training flag."""

    def __init__(self, drop_prob=None):
        self.drop_prob = 0.0 if drop_prob is None else drop_prob
        self.training = True

    def __call__(self, x, key=None, seed: int = 0):
        return drop_path_pallas(x, self.drop_prob, self.training, key=key, seed=seed)


if __name__ == "__main__":
    ok = True

    # --- small f32 NCHW case (matches the PyTorch module's typical input) ---
    key = jax.random.PRNGKey(0)
    x = jax.random.normal(key, (2, 4, 16, 16), dtype=jnp.float32)  # NCHW

    module = DropPath(drop_prob=0.2)
    y = jax.block_until_ready(module(x, seed=0))

    keep_prob = 1.0 - module.drop_prob
    for b in range(x.shape[0]):
        yb = y[b]
        is_zero = bool(jnp.allclose(yb, 0.0, atol=1e-6))
        is_scaled = bool(jnp.allclose(yb, x[b] / keep_prob, atol=1e-5))
        ok = ok and (is_zero or is_scaled)

    # --- bf16 + megacore-split path (medium tensor -> >=2 grid programs) ---
    xb = jax.random.normal(jax.random.PRNGKey(1), (16, 64, 32, 32), dtype=jnp.bfloat16)
    yb16 = jax.block_until_ready(drop_path_pallas(xb, 0.2, True, seed=3))
    ref_scaled = (xb.astype(jnp.float32) / keep_prob).astype(jnp.bfloat16).astype(jnp.float32)
    yb16_f = yb16.astype(jnp.float32)
    for b in range(xb.shape[0]):
        is_zero = bool(jnp.allclose(yb16_f[b], 0.0, atol=1e-6))
        is_scaled = bool(jnp.allclose(yb16_f[b], ref_scaled[b], rtol=2e-2, atol=1e-2))
        ok = ok and (is_zero or is_scaled)

    # --- eval path: identity (no kernel launch, matching PyTorch) ---
    module.training = False
    y_eval = jax.block_until_ready(module(x))
    ok = ok and bool(jnp.allclose(y_eval, x))

    if not ok:
        raise RuntimeError("DropPath Pallas kernel produced unexpected output")
    print("KERNEL_OK")
</pallas_src>

<mosaic_0001>
module attributes {stable_mosaic.version = 11 : i64} {
  func.func @_drop_path_kernel(%arg0: i32, %arg1: i32, %arg2: memref<2x1xf32, #tpu.memory_space<vmem>>, %arg3: memref<2x1024xf32, #tpu.memory_space<vmem>>, %arg4: memref<2x1024xf32, #tpu.memory_space<vmem>>) attributes {dimension_semantics = [#tpu.dimension_semantics<parallel>, #tpu.dimension_semantics<parallel>], iteration_bounds = array<i64: 1, 1>, scalar_prefetch = 0 : i64, scratch_operands = 0 : i64, tpu.core_type = #tpu.core_type<tc>, window_params = [{transform_indices = @transform_0, window_bounds = array<i64: 2, 1>}, {transform_indices = @transform_1, window_bounds = array<i64: 2, 1024>}, {transform_indices = @transform_2, window_bounds = array<i64: 2, 1024>}]} {
    %c0 = arith.constant 0 : index
    %c0_0 = arith.constant 0 : index
    %0 = vector.load %arg3[%c0, %c0_0] : memref<2x1024xf32, #tpu.memory_space<vmem>>, vector<2x1024xf32>
    %c0_1 = arith.constant 0 : index
    %c0_2 = arith.constant 0 : index
    %1 = vector.load %arg2[%c0_1, %c0_2] : memref<2x1xf32, #tpu.memory_space<vmem>>, vector<2x1xf32>
    %2 = vector.broadcast %1 : vector<2x1xf32> to vector<2x1024xf32>
    %3 = arith.mulf %0, %2 : vector<2x1024xf32>
    %c0_3 = arith.constant 0 : index
    %c0_4 = arith.constant 0 : index
    %4 = vector.load %arg4[%c0_3, %c0_4] : memref<2x1024xf32, #tpu.memory_space<vmem>>, vector<2x1024xf32>
    tpu.vector_store %arg4[%c0_3, %c0_4], %3 {strides = array<i32>} : memref<2x1024xf32, #tpu.memory_space<vmem>>, vector<2x1024xf32>,
    return
  }
  func.func @transform_0(%arg0: i32, %arg1: i32) -> (i32, i32) {
    %c0_i32 = arith.constant 0 : i32
    %c0_i32_0 = arith.constant 0 : i32
    return %arg0, %c0_i32 : i32, i32
  }
  func.func @transform_1(%arg0: i32, %arg1: i32) -> (i32, i32) {
    %c0_i32 = arith.constant 0 : i32
    return %arg0, %arg1 : i32, i32
  }
  func.func @transform_2(%arg0: i32, %arg1: i32) -> (i32, i32) {
    %c0_i32 = arith.constant 0 : i32
    return %arg0, %arg1 : i32, i32
  }
}

</mosaic_0001>

<llo_original>
// kernel: tpu_custom_call.1
$region0: #{tpu_custom_call.1}
  #allocation0 [shape = 'u32[]', space=smem, size = 0x4, offset = 0x4, fixed_abs, tag = 'smem constant byte address 0x4 - core index']
  #allocation1 [shape = 'u32[72,128]{1,0:T(1,128)}', space=vmem, size = 0x9000, scoped, tag = 'internal scratch']
  %s0 = inlined_call_operand.vmem [shape: f32[2,1], index: 0, kind: input, shape index: {}]
  %s1 = inlined_call_operand.hbm [shape: f32[2,1024], index: 1, kind: input, shape index: {}]
  %s2 = inlined_call_operand.hbm [shape: f32[2,1024], index: 2, kind: output, shape index: {}]
  %s3 = sld [smem:[#allocation0]]
  $region22: #{tpu_custom_call.1} parent=0
    _
  %s5 = ssub.s32 1, %s3
  %s6 = scalar_select 0, %s5, %s3
  $region1: #{tpu_custom_call.1} parent=0
    #allocation2 [shape = 'u8[8192]{0}', space=vmem, size = 0x2000, scoped, tag = 'input window, operand 1, single buffered']
    #allocation3 [shape = 's32[1]{0}', space=sflag, size = 0x4, scoped, tag = 'scoped memory for tpu_custom_call.1']
    #allocation4 [shape = 's32[1]{0}', space=sflag, size = 0x4, scoped, tag = 'scoped memory for tpu_custom_call.1']
    #allocation5 [shape = 'u8[8192]{0}', space=vmem, size = 0x2000, scoped, tag = 'output window, operand 0, single buffered']
    %7 = vsyncpa [#allocation3], 0
    %8 = vsyncpa [#allocation4], 0
    // Predicated region
    $region2: #{tpu_custom_call.1} parent=1 // pred_check
      _
    $region3: #{tpu_custom_call.1} parent=1 // pred_check_branch
      %10 = sbr.rel (0) target = $region5
    $region4: #{tpu_custom_call.1} parent=1 // pred_region
      _
    $region5: #{tpu_custom_call.1} parent=1 // pred_fallthru
      _
    // Predicated region
    $region6: #{tpu_custom_call.1} parent=1 // pred_check
      _
    $region7: #{tpu_custom_call.1} parent=1 // pred_check_branch
      %12 = sbr.rel (0) target = $region9
    $region8: #{tpu_custom_call.1} parent=1 // pred_region
      %14 = vsyncadd [#allocation3], 0
      %s16 = sshll.u32 %s1, 4
      %s17 = int_to_ptr.hbm [resolvable:$true] %s16
      %s18 = sshll.u32 [#allocation2], 4
      %s19 = int_to_ptr.vmem [resolvable:$true] %s18
      %21 = dma.hbm_to_vmem [thread:$0]  %s17, 256, %s19, [#allocation3]
    $region9: #{tpu_custom_call.1} parent=1 // pred_fallthru
      _
    // Predicated region
    $region10: #{tpu_custom_call.1} parent=1 // pred_check
      _
    $region11: #{tpu_custom_call.1} parent=1 // pred_check_branch
      %23 = sbr.rel (0) target = $region13
    $region12: #{tpu_custom_call.1} parent=1 // pred_region
      %25 = dma.done [#allocation3], 256
    $region13: #{tpu_custom_call.1} parent=1 // pred_fallthru
      _
    %v26 = vld [vmem:[#allocation2] sm:$0xff]
    %v27 = vld [vmem:[#allocation2 + $0x8] sm:$0xff]
    %v28 = vld [vmem:[%s0] sm:$0x3]
    %30 = vset.pattern.permute.xlu0 0
    %31 = vperm.xlu0 %30, %v28
    %v32 = vpop.permute.xlu0 %31
    %v34 = vunpack.c.l.s4 269488144
    %v35 = vunpack.c.0.s8 %v34
    %v36 = vperm.slane %v32, %v35
    %v38 = vmul.f32 %v26, %v36
    %v39 = vmul.f32 %v27, %v36
    %40 = vst [vmem:[#allocation5] sm:$0xff] %v38
    %41 = vst [vmem:[#allocation5 + $0x8] sm:$0xff] %v39
    // Predicated region
    $region14: #{tpu_custom_call.1} parent=1 // pred_check
      _
    $region15: #{tpu_custom_call.1} parent=1 // pred_check_branch
      %43 = sbr.rel (0) target = $region17
    $region16: #{tpu_custom_call.1} parent=1 // pred_region
      %45 = vsyncadd [#allocation4], 0
      %s47 = sshll.u32 [#allocation5], 4
      %s48 = int_to_ptr.vmem [resolvable:$true] %s47
      %s49 = sshll.u32 %s2, 4
      %s50 = int_to_ptr.hbm [resolvable:$true] %s49
      %52 = dma.vmem_to_hbm [thread:$0]  %s48, 256, %s50, [#allocation4]
    $region17: #{tpu_custom_call.1} parent=1 // pred_fallthru
      _
    // Predicated region
    $region18: #{tpu_custom_call.1} parent=1 // pred_check
      _
    $region19: #{tpu_custom_call.1} parent=1 // pred_check_branch
      %54 = sbr.rel (0) target = $region21
    $region20: #{tpu_custom_call.1} parent=1 // pred_region
      %56 = dma.done [#allocation4], 256
    $region21: #{tpu_custom_call.1} parent=1 // pred_fallthru
      _
    %57 = vsyncpa [#allocation3], 1
    %58 = vsyncpa [#allocation4], 1

</llo_original>
